<compile_context>
chip_gen: v5e
topology: v5e:2x2
jax: 0.10.0
libtpu: 0.0.40
codegen_flags: <defaults>
</compile_context>

<pallas_src>
import functools

import jax
import jax.numpy as jnp
from jax.experimental import pallas as pl
from jax.experimental.pallas import tpu as pltpu

_LANE = 128
_DEFAULT_TILE_N = 512


def _round_up(x, m):
    return ((x + m - 1) // m) * m


def _ct_loss_kernel(logits_ref, labels_ref, weight_ref, out_ref,
                    cnt_ref, sce_ref, sw_ref, swce_ref, swce2_ref,
                    *, num_classes, n_total):
    # ---- init carried per-class accumulators on the first grid step ----
    @pl.when(pl.program_id(0) == 0)
    def _():
        cnt_ref[...] = jnp.zeros_like(cnt_ref)
        sce_ref[...] = jnp.zeros_like(sce_ref)
        sw_ref[...] = jnp.zeros_like(sw_ref)
        swce_ref[...] = jnp.zeros_like(swce_ref)
        swce2_ref[...] = jnp.zeros_like(swce2_ref)

    # Upcast after the block is already in VMEM (HBM DMA stays in input dtype).
    lg = logits_ref[...].astype(jnp.float32)        # (C, TILE_N)
    labels = labels_ref[...]                        # (1, TILE_N) int32, -1 = padding
    w = weight_ref[...].astype(jnp.float32)         # (1, TILE_N)
    tile_n = lg.shape[1]

    # ---- per-sample cross entropy, lane-dense over the batch ----
    m = jnp.max(lg, axis=0, keepdims=True)                                    # (1, TILE_N)
    lse = jnp.log(jnp.sum(jnp.exp(lg - m), axis=0, keepdims=True)) + m        # (1, TILE_N)

    class_ids = jax.lax.broadcasted_iota(jnp.int32, (num_classes, tile_n), 0)  # (C, TILE_N)
    one_hot = (class_ids == labels).astype(jnp.float32)                        # (C, TILE_N)
    picked = jnp.sum(one_hot * lg, axis=0, keepdims=True)                      # (1, TILE_N)
    ce = lse - picked                                                          # (1, TILE_N)
    wce = w * ce                                                               # (1, TILE_N)

    # ---- streaming per-class statistics (padded rows: one_hot column is all zero) ----
    cnt_ref[...] += jnp.sum(one_hot, axis=1, keepdims=True)                    # (C, 1)
    sce_ref[...] += jnp.sum(one_hot * ce, axis=1, keepdims=True)
    sw_ref[...] += jnp.sum(one_hot * w, axis=1, keepdims=True)
    swce_ref[...] += jnp.sum(one_hot * wce, axis=1, keepdims=True)
    swce2_ref[...] += jnp.sum(one_hot * (wce * ce), axis=1, keepdims=True)

    # ---- finalize on the last grid step ----
    @pl.when(pl.program_id(0) == pl.num_programs(0) - 1)
    def _():
        mean = sce_ref[...] / jnp.maximum(cnt_ref[...], 1.0)                   # (C, 1)
        # sum_n w (ce - mean)^2 = sum w ce^2 - 2 mean sum w ce + mean^2 sum w
        loss_c = (swce2_ref[...] - 2.0 * mean * swce_ref[...]
                  + mean * mean * sw_ref[...])
        total = jnp.sum(loss_c)
        out_ref[0, 0] = jnp.sqrt(total / n_total)


def collaborative_training_loss(logits, labels, weight, *, tile_n=None):
    """logits: (N, C) float (f32/bf16), labels: (N,) int, weight: (N,) float -> f32 scalar."""
    n, c = logits.shape
    if tile_n is None:
        tile_n = min(_DEFAULT_TILE_N, _round_up(n, _LANE))
    tile_n = _round_up(tile_n, _LANE)
    n_pad = _round_up(max(n, tile_n), tile_n)
    pad = n_pad - n

    # Lane-dense layout: batch on the lane axis (last), small class dim on sublanes.
    # Padded samples get label == -1 so they never match any class.
    logits_t = jnp.pad(jnp.transpose(logits), ((0, 0), (0, pad)))              # (C, n_pad)
    labels_p = jnp.pad(labels.astype(jnp.int32), (0, pad),
                       constant_values=-1).reshape(1, n_pad)                   # (1, n_pad)
    weight_p = jnp.pad(weight, (0, pad)).reshape(1, n_pad)                     # (1, n_pad)

    grid = (n_pad // tile_n,)
    kernel = functools.partial(_ct_loss_kernel, num_classes=c, n_total=n)

    out = pl.pallas_call(
        kernel,
        out_shape=jax.ShapeDtypeStruct((1, 1), jnp.float32),
        grid_spec=pltpu.PrefetchScalarGridSpec(
            num_scalar_prefetch=0,
            grid=grid,
            in_specs=[
                pl.BlockSpec((c, tile_n), lambda i: (0, i)),   # logits (input dtype)
                pl.BlockSpec((1, tile_n), lambda i: (0, i)),   # labels, lane-dense
                pl.BlockSpec((1, tile_n), lambda i: (0, i)),   # weights, lane-dense
            ],
            out_specs=pl.BlockSpec(memory_space=pltpu.MemorySpace.SMEM),
            scratch_shapes=[pltpu.VMEM((c, 1), jnp.float32)] * 5,
        ),
        compiler_params=pltpu.CompilerParams(
            # single grid axis is a streaming reduction with carried accumulators
            dimension_semantics=("arbitrary",),
        ),
    )(logits_t, labels_p, weight_p)
    return out[0, 0]


def _reference(logits, labels, weight):
    """Pure-JAX reference mirroring the PyTorch module."""
    logits = logits.astype(jnp.float32)
    n, c = logits.shape
    lse = jax.nn.logsumexp(logits, axis=-1)
    ce = lse - jnp.take_along_axis(logits, labels[:, None].astype(jnp.int32),
                                   axis=-1)[:, 0]
    total = jnp.float32(0.0)
    for cls in range(c):
        mask = (labels == cls).astype(jnp.float32)
        cnt = jnp.sum(mask)
        mean_c = jnp.where(cnt > 0, jnp.sum(ce * mask) / jnp.maximum(cnt, 1.0), 0.0)
        total = total + jnp.sum(((ce - mean_c) ** 2) * weight * mask)
    return jnp.sqrt(total / n)


if __name__ == "__main__":
    num_classes = 4
    key = jax.random.PRNGKey(0)
    k1, k2, k3, k4, k5, k6 = jax.random.split(key, 6)

    # --- small case (single tile; exercises the 16 -> 128 padding path) ---
    n_small = 16
    logits = jax.random.normal(k1, (n_small, num_classes), dtype=jnp.float32)
    labels = jax.random.randint(k2, (n_small,), 0, num_classes, dtype=jnp.int32)
    weight = jax.random.uniform(k3, (n_small,), dtype=jnp.float32)

    loss = jax.block_until_ready(collaborative_training_loss(logits, labels, weight))
    ref = jax.block_until_ready(_reference(logits, labels, weight))
    assert jnp.allclose(loss, ref, rtol=1e-5, atol=1e-5), (loss, ref)

    # --- bf16 logits: HBM DMA stays bf16, upcast happens inside the kernel ---
    logits_bf16 = logits.astype(jnp.bfloat16)
    loss_bf = jax.block_until_ready(
        collaborative_training_loss(logits_bf16, labels, weight))
    ref_bf = jax.block_until_ready(
        _reference(logits_bf16.astype(jnp.float32), labels, weight))
    assert jnp.allclose(loss_bf, ref_bf, rtol=1e-4, atol=1e-4), (loss_bf, ref_bf)

    # --- larger case forcing a multi-step grid (streaming accumulators across tiles) ---
    n_big = 300
    logits_b = jax.random.normal(k4, (n_big, num_classes), dtype=jnp.float32)
    labels_b = jax.random.randint(k5, (n_big,), 0, num_classes, dtype=jnp.int32)
    weight_b = jax.random.uniform(k6, (n_big,), dtype=jnp.float32)

    loss_b = jax.block_until_ready(
        collaborative_training_loss(logits_b, labels_b, weight_b, tile_n=128))
    ref_b = jax.block_until_ready(_reference(logits_b, labels_b, weight_b))
    assert jnp.allclose(loss_b, ref_b, rtol=1e-4, atol=1e-4), (loss_b, ref_b)

    print("KERNEL_OK")
</pallas_src>

<mosaic_0001>
module attributes {stable_mosaic.version = 11 : i64} {
  func.func @_ct_loss_kernel(%arg0: i32, %arg1: memref<4x128xf32, #tpu.memory_space<vmem>>, %arg2: memref<1x128xi32, #tpu.memory_space<vmem>>, %arg3: memref<1x128xf32, #tpu.memory_space<vmem>>, %arg4: memref<1x1xf32, #tpu.memory_space<smem>>, %arg5: memref<4x1xf32, #tpu.memory_space<vmem>>, %arg6: memref<4x1xf32, #tpu.memory_space<vmem>>, %arg7: memref<4x1xf32, #tpu.memory_space<vmem>>, %arg8: memref<4x1xf32, #tpu.memory_space<vmem>>, %arg9: memref<4x1xf32, #tpu.memory_space<vmem>>) attributes {dimension_semantics = [#tpu.dimension_semantics<arbitrary>], iteration_bounds = array<i64: 1>, scalar_prefetch = 0 : i64, scratch_operands = 5 : i64, tpu.core_type = #tpu.core_type<tc>, window_params = [{transform_indices = @transform_0, window_bounds = array<i64: 4, 128>}, {transform_indices = @transform_1, window_bounds = array<i64: 1, 128>}, {transform_indices = @transform_2, window_bounds = array<i64: 1, 128>}, {transform_indices = @transform_3, window_bounds = array<i64: 1, 1>}]} {
    %c0_i32 = arith.constant 0 : i32
    %0 = arith.cmpi eq, %arg0, %c0_i32 : i32
    %1 = arith.extui %0 : i1 to i32
    %c0_i32_0 = arith.constant 0 : i32
    %2 = arith.cmpi ne, %1, %c0_i32_0 : i32
    scf.if %2 {
      %cst_35 = arith.constant 0.000000e+00 : f32
      %62 = vector.broadcast %cst_35 : f32 to vector<4x1xf32>
      %c0_36 = arith.constant 0 : index
      %c0_37 = arith.constant 0 : index
      %63 = vector.load %arg5[%c0_36, %c0_37] : memref<4x1xf32, #tpu.memory_space<vmem>>, vector<4x1xf32>
      tpu.vector_store %arg5[%c0_36, %c0_37], %62 {strides = array<i32>} : memref<4x1xf32, #tpu.memory_space<vmem>>, vector<4x1xf32>,
      %cst_38 = arith.constant 0.000000e+00 : f32
      %64 = vector.broadcast %cst_38 : f32 to vector<4x1xf32>
      %c0_39 = arith.constant 0 : index
      %c0_40 = arith.constant 0 : index
      %65 = vector.load %arg6[%c0_39, %c0_40] : memref<4x1xf32, #tpu.memory_space<vmem>>, vector<4x1xf32>
      tpu.vector_store %arg6[%c0_39, %c0_40], %64 {strides = array<i32>} : memref<4x1xf32, #tpu.memory_space<vmem>>, vector<4x1xf32>,
      %cst_41 = arith.constant 0.000000e+00 : f32
      %66 = vector.broadcast %cst_41 : f32 to vector<4x1xf32>
      %c0_42 = arith.constant 0 : index
      %c0_43 = arith.constant 0 : index
      %67 = vector.load %arg7[%c0_42, %c0_43] : memref<4x1xf32, #tpu.memory_space<vmem>>, vector<4x1xf32>
      tpu.vector_store %arg7[%c0_42, %c0_43], %66 {strides = array<i32>} : memref<4x1xf32, #tpu.memory_space<vmem>>, vector<4x1xf32>,
      %cst_44 = arith.constant 0.000000e+00 : f32
      %68 = vector.broadcast %cst_44 : f32 to vector<4x1xf32>
      %c0_45 = arith.constant 0 : index
      %c0_46 = arith.constant 0 : index
      %69 = vector.load %arg8[%c0_45, %c0_46] : memref<4x1xf32, #tpu.memory_space<vmem>>, vector<4x1xf32>
      tpu.vector_store %arg8[%c0_45, %c0_46], %68 {strides = array<i32>} : memref<4x1xf32, #tpu.memory_space<vmem>>, vector<4x1xf32>,
      %cst_47 = arith.constant 0.000000e+00 : f32
      %70 = vector.broadcast %cst_47 : f32 to vector<4x1xf32>
      %c0_48 = arith.constant 0 : index
      %c0_49 = arith.constant 0 : index
      %71 = vector.load %arg9[%c0_48, %c0_49] : memref<4x1xf32, #tpu.memory_space<vmem>>, vector<4x1xf32>
      tpu.vector_store %arg9[%c0_48, %c0_49], %70 {strides = array<i32>} : memref<4x1xf32, #tpu.memory_space<vmem>>, vector<4x1xf32>,
    } else {
    }
    %c0 = arith.constant 0 : index
    %c0_1 = arith.constant 0 : index
    %3 = vector.load %arg1[%c0, %c0_1] : memref<4x128xf32, #tpu.memory_space<vmem>>, vector<4x128xf32>
    %c0_2 = arith.constant 0 : index
    %c0_3 = arith.constant 0 : index
    %4 = vector.load %arg2[%c0_2, %c0_3] : memref<1x128xi32, #tpu.memory_space<vmem>>, vector<1x128xi32>
    %c0_4 = arith.constant 0 : index
    %c0_5 = arith.constant 0 : index
    %5 = vector.load %arg3[%c0_4, %c0_5] : memref<1x128xf32, #tpu.memory_space<vmem>>, vector<1x128xf32>
    %cst = arith.constant dense<0xFF800000> : vector<128xf32>
    %6 = vector.multi_reduction <maximumf>, %3, %cst [0] : vector<4x128xf32> to vector<128xf32>
    %7 = vector.shape_cast %6 : vector<128xf32> to vector<1x128xf32>
    %8 = vector.broadcast %7 : vector<1x128xf32> to vector<4x128xf32>
    %9 = arith.subf %3, %8 : vector<4x128xf32>
    %10 = math.exp %9 : vector<4x128xf32>
    %cst_6 = arith.constant dense<0.000000e+00> : vector<128xf32>
    %11 = vector.multi_reduction <add>, %10, %cst_6 [0] : vector<4x128xf32> to vector<128xf32>
    %12 = vector.shape_cast %11 : vector<128xf32> to vector<1x128xf32>
    %13 = math.log %12 : vector<1x128xf32>
    %14 = arith.addf %13, %7 : vector<1x128xf32>
    %15 = tpu.iota {dimensions = array<i32: 0>} : vector<4x128xi32>
    %16 = vector.broadcast %4 : vector<1x128xi32> to vector<4x128xi32>
    %17 = arith.cmpi eq, %15, %16 : vector<4x128xi32>
    %18 = arith.extui %17 : vector<4x128xi1> to vector<4x128xi32>
    %19 = arith.sitofp %18 : vector<4x128xi32> to vector<4x128xf32>
    %20 = arith.mulf %19, %3 : vector<4x128xf32>
    %cst_7 = arith.constant dense<0.000000e+00> : vector<128xf32>
    %21 = vector.multi_reduction <add>, %20, %cst_7 [0] : vector<4x128xf32> to vector<128xf32>
    %22 = vector.shape_cast %21 : vector<128xf32> to vector<1x128xf32>
    %23 = arith.subf %14, %22 : vector<1x128xf32>
    %24 = arith.mulf %5, %23 : vector<1x128xf32>
    %c0_8 = arith.constant 0 : index
    %c0_9 = arith.constant 0 : index
    %25 = vector.load %arg5[%c0_8, %c0_9] : memref<4x1xf32, #tpu.memory_space<vmem>>, vector<4x1xf32>
    %cst_10 = arith.constant dense<0.000000e+00> : vector<4xf32>
    %26 = vector.multi_reduction <add>, %19, %cst_10 [1] : vector<4x128xf32> to vector<4xf32>
    %27 = vector.shape_cast %26 : vector<4xf32> to vector<4x1xf32>
    %28 = arith.addf %25, %27 : vector<4x1xf32>
    %c0_11 = arith.constant 0 : index
    %c0_12 = arith.constant 0 : index
    %29 = vector.load %arg5[%c0_11, %c0_12] : memref<4x1xf32, #tpu.memory_space<vmem>>, vector<4x1xf32>
    tpu.vector_store %arg5[%c0_11, %c0_12], %28 {strides = array<i32>} : memref<4x1xf32, #tpu.memory_space<vmem>>, vector<4x1xf32>,
    %c0_13 = arith.constant 0 : index
    %c0_14 = arith.constant 0 : index
    %30 = vector.load %arg6[%c0_13, %c0_14] : memref<4x1xf32, #tpu.memory_space<vmem>>, vector<4x1xf32>
    %31 = vector.broadcast %23 : vector<1x128xf32> to vector<4x128xf32>
    %32 = arith.mulf %19, %31 : vector<4x128xf32>
    %cst_15 = arith.constant dense<0.000000e+00> : vector<4xf32>
    %33 = vector.multi_reduction <add>, %32, %cst_15 [1] : vector<4x128xf32> to vector<4xf32>
    %34 = vector.shape_cast %33 : vector<4xf32> to vector<4x1xf32>
    %35 = arith.addf %30, %34 : vector<4x1xf32>
    %c0_16 = arith.constant 0 : index
    %c0_17 = arith.constant 0 : index
    %36 = vector.load %arg6[%c0_16, %c0_17] : memref<4x1xf32, #tpu.memory_space<vmem>>, vector<4x1xf32>
    tpu.vector_store %arg6[%c0_16, %c0_17], %35 {strides = array<i32>} : memref<4x1xf32, #tpu.memory_space<vmem>>, vector<4x1xf32>,
    %c0_18 = arith.constant 0 : index
    %c0_19 = arith.constant 0 : index
    %37 = vector.load %arg7[%c0_18, %c0_19] : memref<4x1xf32, #tpu.memory_space<vmem>>, vector<4x1xf32>
    %38 = vector.broadcast %5 : vector<1x128xf32> to vector<4x128xf32>
    %39 = arith.mulf %19, %38 : vector<4x128xf32>
    %cst_20 = arith.constant dense<0.000000e+00> : vector<4xf32>
    %40 = vector.multi_reduction <add>, %39, %cst_20 [1] : vector<4x128xf32> to vector<4xf32>
    %41 = vector.shape_cast %40 : vector<4xf32> to vector<4x1xf32>
    %42 = arith.addf %37, %41 : vector<4x1xf32>
    %c0_21 = arith.constant 0 : index
    %c0_22 = arith.constant 0 : index
    %43 = vector.load %arg7[%c0_21, %c0_22] : memref<4x1xf32, #tpu.memory_space<vmem>>, vector<4x1xf32>
    tpu.vector_store %arg7[%c0_21, %c0_22], %42 {strides = array<i32>} : memref<4x1xf32, #tpu.memory_space<vmem>>, vector<4x1xf32>,
    %c0_23 = arith.constant 0 : index
    %c0_24 = arith.constant 0 : index
    %44 = vector.load %arg8[%c0_23, %c0_24] : memref<4x1xf32, #tpu.memory_space<vmem>>, vector<4x1xf32>
    %45 = vector.broadcast %24 : vector<1x128xf32> to vector<4x128xf32>
    %46 = arith.mulf %19, %45 : vector<4x128xf32>
    %cst_25 = arith.constant dense<0.000000e+00> : vector<4xf32>
    %47 = vector.multi_reduction <add>, %46, %cst_25 [1] : vector<4x128xf32> to vector<4xf32>
    %48 = vector.shape_cast %47 : vector<4xf32> to vector<4x1xf32>
    %49 = arith.addf %44, %48 : vector<4x1xf32>
    %c0_26 = arith.constant 0 : index
    %c0_27 = arith.constant 0 : index
    %50 = vector.load %arg8[%c0_26, %c0_27] : memref<4x1xf32, #tpu.memory_space<vmem>>, vector<4x1xf32>
    tpu.vector_store %arg8[%c0_26, %c0_27], %49 {strides = array<i32>} : memref<4x1xf32, #tpu.memory_space<vmem>>, vector<4x1xf32>,
    %c0_28 = arith.constant 0 : index
    %c0_29 = arith.constant 0 : index
    %51 = vector.load %arg9[%c0_28, %c0_29] : memref<4x1xf32, #tpu.memory_space<vmem>>, vector<4x1xf32>
    %52 = arith.mulf %24, %23 : vector<1x128xf32>
    %53 = vector.broadcast %52 : vector<1x128xf32> to vector<4x128xf32>
    %54 = arith.mulf %19, %53 : vector<4x128xf32>
    %cst_30 = arith.constant dense<0.000000e+00> : vector<4xf32>
    %55 = vector.multi_reduction <add>, %54, %cst_30 [1] : vector<4x128xf32> to vector<4xf32>
    %56 = vector.shape_cast %55 : vector<4xf32> to vector<4x1xf32>
    %57 = arith.addf %51, %56 : vector<4x1xf32>
    %c0_31 = arith.constant 0 : index
    %c0_32 = arith.constant 0 : index
    %58 = vector.load %arg9[%c0_31, %c0_32] : memref<4x1xf32, #tpu.memory_space<vmem>>, vector<4x1xf32>
    tpu.vector_store %arg9[%c0_31, %c0_32], %57 {strides = array<i32>} : memref<4x1xf32, #tpu.memory_space<vmem>>, vector<4x1xf32>,
    %c0_i32_33 = arith.constant 0 : i32
    %59 = arith.cmpi eq, %arg0, %c0_i32_33 : i32
    %60 = arith.extui %59 : i1 to i32
    %c0_i32_34 = arith.constant 0 : i32
    %61 = arith.cmpi ne, %60, %c0_i32_34 : i32
    scf.if %61 {
      %c0_35 = arith.constant 0 : index
      %c0_36 = arith.constant 0 : index
      %62 = vector.load %arg6[%c0_35, %c0_36] : memref<4x1xf32, #tpu.memory_space<vmem>>, vector<4x1xf32>
      %c0_37 = arith.constant 0 : index
      %c0_38 = arith.constant 0 : index
      %63 = vector.load %arg5[%c0_37, %c0_38] : memref<4x1xf32, #tpu.memory_space<vmem>>, vector<4x1xf32>
      %cst_39 = arith.constant 1.000000e+00 : f32
      %64 = vector.broadcast %cst_39 : f32 to vector<4x1xf32>
      %65 = arith.maximumf %63, %64 : vector<4x1xf32>
      %66 = arith.divf %62, %65 : vector<4x1xf32>
      %c0_40 = arith.constant 0 : index
      %c0_41 = arith.constant 0 : index
      %67 = vector.load %arg9[%c0_40, %c0_41] : memref<4x1xf32, #tpu.memory_space<vmem>>, vector<4x1xf32>
      %cst_42 = arith.constant 2.000000e+00 : f32
      %68 = vector.broadcast %cst_42 : f32 to vector<4x1xf32>
      %69 = arith.mulf %68, %66 : vector<4x1xf32>
      %c0_43 = arith.constant 0 : index
      %c0_44 = arith.constant 0 : index
      %70 = vector.load %arg8[%c0_43, %c0_44] : memref<4x1xf32, #tpu.memory_space<vmem>>, vector<4x1xf32>
      %71 = arith.mulf %69, %70 : vector<4x1xf32>
      %72 = arith.subf %67, %71 : vector<4x1xf32>
      %73 = arith.mulf %66, %66 : vector<4x1xf32>
      %c0_45 = arith.constant 0 : index
      %c0_46 = arith.constant 0 : index
      %74 = vector.load %arg7[%c0_45, %c0_46] : memref<4x1xf32, #tpu.memory_space<vmem>>, vector<4x1xf32>
      %75 = arith.mulf %73, %74 : vector<4x1xf32>
      %76 = arith.addf %72, %75 : vector<4x1xf32>
      %77 = vector.shape_cast %76 : vector<4x1xf32> to vector<1x4x1xf32>
      %cst_47 = arith.constant dense<0.000000e+00> : vector<1xf32>
      %78 = vector.multi_reduction <add>, %77, %cst_47 [1, 2] : vector<1x4x1xf32> to vector<1xf32>
      %79 = vector.shape_cast %78 : vector<1xf32> to vector<1x1x1xf32>
      %80 = vector.extract %79[0, 0, 0] : f32 from vector<1x1x1xf32>
      %cst_48 = arith.constant 1.600000e+01 : f32
      %81 = arith.divf %80, %cst_48 : f32
      %82 = math.sqrt %81 : f32
      %c0_49 = arith.constant 0 : index
      %c0_50 = arith.constant 0 : index
      %83 = memref.load %arg4[%c0_49, %c0_50] : memref<1x1xf32, #tpu.memory_space<smem>>
      memref.store %82, %arg4[%c0_49, %c0_50] : memref<1x1xf32, #tpu.memory_space<smem>>
    } else {
    }
    return
  }
  func.func @transform_0(%arg0: i32) -> (i32, i32) {
    %c0_i32 = arith.constant 0 : i32
    %c0_i32_0 = arith.constant 0 : i32
    return %c0_i32, %arg0 : i32, i32
  }
  func.func @transform_1(%arg0: i32) -> (i32, i32) {
    %c0_i32 = arith.constant 0 : i32
    %c0_i32_0 = arith.constant 0 : i32
    return %c0_i32, %arg0 : i32, i32
  }
  func.func @transform_2(%arg0: i32) -> (i32, i32) {
    %c0_i32 = arith.constant 0 : i32
    %c0_i32_0 = arith.constant 0 : i32
    return %c0_i32, %arg0 : i32, i32
  }
  func.func @transform_3(%arg0: i32) -> (i32, i32) {
    %c0_i32 = arith.constant 0 : i32
    %c0_i32_0 = arith.constant 0 : i32
    %c0_i32_1 = arith.constant 0 : i32
    return %c0_i32, %c0_i32_0 : i32, i32
  }
}

</mosaic_0001>

<llo_original>
// kernel: tpu_custom_call.1
$region0: #{tpu_custom_call.1}
  #allocation0 [shape = 'u32[]', space=smem, size = 0x4, offset = 0x4, fixed_abs, tag = 'smem constant byte address 0x4 - core index']
  #allocation1 [shape = 'u32[72,128]{1,0:T(1,128)}', space=vmem, size = 0x9000, scoped, tag = 'internal scratch']
  #allocation2 [shape = 'f32[4,1]{1,0:T(4,128)}', space=vmem, size = 0x800, scoped, tag = 'scratch operand']
  #allocation3 [shape = 'f32[4,1]{1,0:T(4,128)}', space=vmem, size = 0x800, scoped, tag = 'scratch operand']
  #allocation4 [shape = 'f32[4,1]{1,0:T(4,128)}', space=vmem, size = 0x800, scoped, tag = 'scratch operand']
  #allocation5 [shape = 'f32[4,1]{1,0:T(4,128)}', space=vmem, size = 0x800, scoped, tag = 'scratch operand']
  #allocation6 [shape = 'f32[4,1]{1,0:T(4,128)}', space=vmem, size = 0x800, scoped, tag = 'scratch operand']
  %s0 = inlined_call_operand.hbm [shape: f32[4,128], index: 0, kind: input, shape index: {}]
  %s1 = inlined_call_operand.hbm [shape: s32[1,128], index: 1, kind: input, shape index: {}]
  %s2 = inlined_call_operand.vmem [shape: f32[1,128], index: 2, kind: input, shape index: {}]
  %s3 = inlined_call_operand.hbm [shape: f32[1,1], index: 3, kind: output, shape index: {}]
  %s4 = sld [smem:[#allocation0]]
  $region38: #{tpu_custom_call.1} parent=0
    _
  %s6 = ssub.s32 1, %s4
  %s7 = scalar_select 0, %s6, %s4
  $region1: #{tpu_custom_call.1} parent=0
    #allocation7 [shape = 'u8[2048]{0}', space=vmem, size = 0x800, scoped, tag = 'input window, operand 0, single buffered']
    #allocation8 [shape = 's32[1]{0}', space=sflag, size = 0x4, scoped, tag = 'scoped memory for tpu_custom_call.1']
    #allocation9 [shape = 's32[1]{0}', space=sflag, size = 0x4, scoped, tag = 'scoped memory for tpu_custom_call.1']
    #allocation10 [shape = 'u8[512]{0}', space=vmem, size = 0x400, scoped, tag = 'input window, operand 1, single buffered']
    #allocation11 [shape = 's32[1]{0}', space=sflag, size = 0x4, scoped, tag = 'scoped memory for tpu_custom_call.1']
    #allocation12 [shape = 'u8[512]{0}', space=smem, size = 0x200, scoped, tag = 'output window, operand 0, single buffered']
    %8 = vsyncpa [#allocation8], 0
    %9 = vsyncpa [#allocation11], 0
    %10 = vsyncpa [#allocation9], 0
    // Predicated region
    $region2: #{tpu_custom_call.1} parent=1 // pred_check
      _
    $region3: #{tpu_custom_call.1} parent=1 // pred_check_branch
      %12 = sbr.rel (0) target = $region5
    $region4: #{tpu_custom_call.1} parent=1 // pred_region
      %14 = vsyncadd [#allocation8], 0
      %s16 = sshll.u32 %s0, 4
      %s17 = int_to_ptr.hbm [resolvable:$true] %s16
      %s18 = sshll.u32 [#allocation7], 4
      %s19 = int_to_ptr.vmem [resolvable:$true] %s18
      %21 = dma.hbm_to_vmem [thread:$0]  %s17, 64, %s19, [#allocation8]
    $region5: #{tpu_custom_call.1} parent=1 // pred_fallthru
      _
    // Predicated region
    $region6: #{tpu_custom_call.1} parent=1 // pred_check
      _
    $region7: #{tpu_custom_call.1} parent=1 // pred_check_branch
      %23 = sbr.rel (0) target = $region9
    $region8: #{tpu_custom_call.1} parent=1 // pred_region
      %25 = vsyncadd [#allocation11], 0
      %s27 = sshll.u32 %s1, 4
      %s28 = int_to_ptr.hbm [resolvable:$true] %s27
      %s29 = sshll.u32 [#allocation10], 4
      %s30 = int_to_ptr.vmem [resolvable:$true] %s29
      %32 = dma.hbm_to_vmem [thread:$0]  %s28, 16, %s30, [#allocation11]
    $region9: #{tpu_custom_call.1} parent=1 // pred_fallthru
      _
    // Predicated region
    $region10: #{tpu_custom_call.1} parent=1 // pred_check
      _
    $region11: #{tpu_custom_call.1} parent=1 // pred_check_branch
      %34 = sbr.rel (0) target = $region13
    $region12: #{tpu_custom_call.1} parent=1 // pred_region
      _
    $region13: #{tpu_custom_call.1} parent=1 // pred_fallthru
      _
    // Predicated region
    $region14: #{tpu_custom_call.1} parent=1 // pred_check
      _
    $region15: #{tpu_custom_call.1} parent=1 // pred_check_branch
      %36 = sbr.rel (0) target = $region17
    $region16: #{tpu_custom_call.1} parent=1 // pred_region
      %38 = dma.done [#allocation8], 64
    $region17: #{tpu_custom_call.1} parent=1 // pred_fallthru
      _
    // Predicated region
    $region18: #{tpu_custom_call.1} parent=1 // pred_check
      _
    $region19: #{tpu_custom_call.1} parent=1 // pred_check_branch
      %40 = sbr.rel (0) target = $region21
    $region20: #{tpu_custom_call.1} parent=1 // pred_region
      %42 = dma.done [#allocation11], 16
    $region21: #{tpu_custom_call.1} parent=1 // pred_fallthru
      _
    %p43 = scmp.eq.s32.totalorder 0, 0
    // Predicated region
    $region22: #{tpu_custom_call.1} parent=1 // pred_check
      %p44 = pneg %p43
    $region23: #{tpu_custom_call.1} parent=1 // pred_check_branch
      %46 = sbr.rel (%p44) target = $region25
    $region24: #{tpu_custom_call.1} parent=1 // pred_region
      %vm47 = vcmask 3072
      %48 = vst.msk [vmem:[#allocation2] sm:$0xf] %vm47, 0.0
      %49 = vst.msk [vmem:[#allocation3] sm:$0xf] %vm47, 0.0
      %50 = vst.msk [vmem:[#allocation4] sm:$0xf] %vm47, 0.0
      %51 = vst.msk [vmem:[#allocation5] sm:$0xf] %vm47, 0.0
      %52 = vst.msk [vmem:[#allocation6] sm:$0xf] %vm47, 0.0
    $region25: #{tpu_custom_call.1} parent=1 // pred_fallthru
      _
    %v53 = vld [vmem:[#allocation7] sm:$0xf]
    %v54 = vld [vmem:[#allocation10] sm:$0x1]
    %v55 = vld [vmem:[%s2] sm:$0x1]
    %vm56 = vcmask 1043456
    %v57 = vsel %vm56, %v53, -inf
    %v58 = vrot.slane %v57, 4
    %v59 = vmax.f32 %v57, %v58
    %v60 = vrot.slane %v59, 2
    %v61 = vmax.f32 %v59, %v60
    %v62 = vrot.slane %v61, 1
    %v63 = vmax.f32 %v61, %v62
    %v64 = vsub.f32 %v53, %v63
    %v65 = vmul.f32 %v64, 1.442695
    %v66 = vpow.pop %v65
    %v67 = vsel %vm56, %v66, 0.0
    %v68 = vrot.slane %v67, 4
    %v69 = vadd.f32 %v67, %v68
    %v70 = vrot.slane %v69, 2
    %v71 = vadd.f32 %v69, %v70
    %v72 = vrot.slane %v71, 1
    %v73 = vadd.f32 %v71, %v72
    %v74 = vlog2.pop %v73
    %v75 = vmul.f32 %v74, 0.6931472
    %v76 = vadd.f32 %v75, %v63
    %v77 = vlaneseq
    %v78 = vshrl.u32 %v77, 7
    %v79 = vperm.slane %v54, 0
    %vm80 = vcmp.eq.s32.totalorder %v78, %v79
    %v81 = vsel %vm80, 1, 0
    %v82 = vcvt.s32.f32 %v81
    %v83 = vmul.f32 %v82, %v53
    %v84 = vsel %vm56, %v83, 0.0
    %v85 = vrot.slane %v84, 4
    %v86 = vadd.f32 %v84, %v85
    %v87 = vrot.slane %v86, 2
    %v88 = vadd.f32 %v86, %v87
    %v89 = vrot.slane %v88, 1
    %v90 = vadd.f32 %v88, %v89
    %v91 = vsub.f32 %v76, %v90
    %v92 = vmul.f32 %v55, %v91
    %v93 = vld [vmem:[#allocation2] sm:$0xf]
    %v94 = vsel %vm56, %v82, 0.0
    %95 = vadd.xlane.f32.xlu0 %v94
    %v96 = vpop.xlane.xlu0 %95
    %v97 = vadd.f32 %v93, %v96
    %vm98 = vcmask 3072
    %99 = vst.msk [vmem:[#allocation2] sm:$0xf] %vm98, %v97
    %v100 = vld [vmem:[#allocation3] sm:$0xf]
    %v101 = vmul.f32 %v82, %v91
    %v102 = vsel %vm56, %v101, 0.0
    %103 = vadd.xlane.f32.xlu0 %v102
    %v104 = vpop.xlane.xlu0 %103
    %v105 = vadd.f32 %v100, %v104
    %106 = vst.msk [vmem:[#allocation3] sm:$0xf] %vm98, %v105
    %v107 = vld [vmem:[#allocation4] sm:$0xf]
    %v109 = vperm.slane %v55, 0
    %v111 = vmul.f32 %v82, %v109
    %v112 = vsel %vm56, %v111, 0.0
    %113 = vadd.xlane.f32.xlu0 %v112
    %v114 = vpop.xlane.xlu0 %113
    %v115 = vadd.f32 %v107, %v114
    %116 = vst.msk [vmem:[#allocation4] sm:$0xf] %vm98, %v115
    %v117 = vld [vmem:[#allocation5] sm:$0xf]
    %v119 = vperm.slane %v92, 0
    %v121 = vmul.f32 %v82, %v119
    %v122 = vsel %vm56, %v121, 0.0
    %123 = vadd.xlane.f32.xlu0 %v122
    %v124 = vpop.xlane.xlu0 %123
    %v125 = vadd.f32 %v117, %v124
    %126 = vst.msk [vmem:[#allocation5] sm:$0xf] %vm98, %v125
    %v127 = vld [vmem:[#allocation6] sm:$0xf]
    %v128 = vmul.f32 %v92, %v91
    %v130 = vperm.slane %v128, 0
    %v132 = vmul.f32 %v82, %v130
    %v133 = vsel %vm56, %v132, 0.0
    %134 = vadd.xlane.f32.xlu0 %v133
    %v135 = vpop.xlane.xlu0 %134
    %v136 = vadd.f32 %v127, %v135
    %137 = vst.msk [vmem:[#allocation6] sm:$0xf] %vm98, %v136
    // Predicated region
    $region26: #{tpu_custom_call.1} parent=1 // pred_check
      %p138 = pneg %p43
    $region27: #{tpu_custom_call.1} parent=1 // pred_check_branch
      %140 = sbr.rel (%p138) target = $region29
    $region28: #{tpu_custom_call.1} parent=1 // pred_region
      %v141 = vld [vmem:[#allocation3] sm:$0xf]
      %v142 = vld [vmem:[#allocation2] sm:$0xf]
      %v143 = vmax.f32 %v142, 1.0
      %v144 = vrcp.pop %v143
      %v145 = vmul.f32 %v143, %v144
      %v146 = vsub.f32 1.0, %v145
      %v147 = vmul.f32 %v144, %v146
      %v148 = vadd.f32 %v144, %v147
      %vm149 = vweird.f32 %v143
      %vm150 = vweird.f32 %v144
      %vm151 = vmor %vm149, %vm150
      %v152 = vsel %vm151, %v144, %v148
      %v153 = vand.u32 2147483647, %v143
      %vm154 = vcmp.eq.f32.partialorder %v153, 8.507059e+37
      %v155 = vand.u32 %v143, 2147483648
      %v156 = vor.u32 1.1754944e-38, %v155
      %v157 = vsel %vm154, %v156, %v152
      %v158 = vmul.f32 %v141, %v157
      %v159 = vld [vmem:[#allocation6] sm:$0xf]
      %v160 = vmul.f32 %v158, 2.0
      %v161 = vld [vmem:[#allocation5] sm:$0xf]
      %v162 = vmul.f32 %v160, %v161
      %v163 = vsub.f32 %v159, %v162
      %v164 = vmul.f32 %v158, %v158
      %v165 = vld [vmem:[#allocation4] sm:$0xf]
      %v166 = vmul.f32 %v164, %v165
      %v167 = vadd.f32 %v163, %v166
      %v168 = vsel %vm98, %v167, 0.0
      %169 = vadd.xlane.f32.xlu0 %v168
      %v170 = vpop.xlane.xlu0 %169
      %v171 = vrot.slane %v170, 4
      %v172 = vadd.f32 %v170, %v171
      %v173 = vrot.slane %v172, 2
      %v174 = vadd.f32 %v172, %v173
      %v175 = vrot.slane %v174, 1
      %v176 = vadd.f32 %v174, %v175
      %s177 = vtos %v176
      %v178 = vrcp.pop 16.0
      %v179 = vmul.f32 16.0, %v178
      %v180 = vsub.f32 1.0, %v179
      %v181 = vmul.f32 %v178, %v180
      %v182 = vadd.f32 %v178, %v181
      %vm183 = vweird.f32 %v178
      %v184 = vsel %vm183, %v178, %v182
      %s185 = vtos %v184
      %s186 = smul.f32 %s177, %s185
      %v187 = vstv %s186
      %v188 = vrsqrt.pop %v187
      %v189 = vmul.f32 %v188, %v187
      %v190 = vmul.f32 %v189, %v188
      %v191 = vmul.f32 0.5, %v190
      %v192 = vsub.f32 1.5, %v191
      %v193 = vmul.f32 %v188, %v192
      %v194 = vmul.f32 %v187, %v193
      %vm195 = vcmp.eq.f32.partialorder %v187, inf
      %v196 = vsel %vm195, %v187, %v194
      %vm197 = vcmp.eq.f32.partialorder %v187, 0.0
      %v198 = vand.u32 %v187, 2147483648
      %v199 = vsel %vm197, %v198, %v196
      %s200 = vtos %v199
      %s201 = scalar_lea.smem [#allocation12], 0
      %202 = sst [smem:[%s201]] %s200
    $region29: #{tpu_custom_call.1} parent=1 // pred_fallthru
      _
    // Predicated region
    $region30: #{tpu_custom_call.1} parent=1 // pred_check
      _
    $region31: #{tpu_custom_call.1} parent=1 // pred_check_branch
      %204 = sbr.rel (0) target = $region33
    $region32: #{tpu_custom_call.1} parent=1 // pred_region
      %206 = vsyncadd [#allocation9], 0
      %s208 = sshll.u32 %s3, 4
      %s209 = int_to_ptr.hbm [resolvable:$true] %s208
      %211 = dma.smem_to_hbm [#allocation12], 16, %s209, [#allocation9]
    $region33: #{tpu_custom_call.1} parent=1 // pred_fallthru
      _
    // Predicated region
    $region34: #{tpu_custom_call.1} parent=1 // pred_check
      _
    $region35: #{tpu_custom_call.1} parent=1 // pred_check_branch
      %213 = sbr.rel (0) target = $region37
    $region36: #{tpu_custom_call.1} parent=1 // pred_region
      %215 = dma.done [#allocation9], 16
    $region37: #{tpu_custom_call.1} parent=1 // pred_fallthru
      _
    %216 = sfence
    %217 = vsyncpa [#allocation8], 1
    %218 = vsyncpa [#allocation11], 1
    %219 = vsyncpa [#allocation9], 1

</llo_original>
